<compile_context>
chip_gen: v7x
topology: tpu7x:2x2x1
jax: 0.10.0
libtpu: 0.0.40
codegen_flags: <defaults>
</compile_context>

<pallas_src>
import functools

import jax
import jax.numpy as jnp
from jax.experimental import pallas as pl
from jax.experimental.pallas import tpu as pltpu


def _round_up(x, m):
    return ((x + m - 1) // m) * m


def _cdiv(a, b):
    return (a + b - 1) // b


# ---------------------------------------------------------------------------
# Signature math used inside the Pallas kernel.
# Layout: channels on sublanes, windows on lanes.
# ---------------------------------------------------------------------------
def _outer(a, b):
    """a: (p, Wb), b: (q, Wb) -> (p*q, Wb) with out[i*q+j] = a[i] * b[j].

    Per-lane VPU multiplies with a cheap sublane broadcast of a single row;
    flattening order matches signatory (first tensor index slowest).
    """
    p = a.shape[0]
    rows = [a[i:i + 1, :] * b for i in range(p)]
    return jnp.concatenate(rows, axis=0)


def _chen_signature(points, depth):
    """Truncated signature of the path (0, points[0], ..., points[-1]).

    points: list of (d, Wb) f32 arrays (basepoint=True -> start at 0).
    Returns a list of `depth` arrays; level k has shape (d**k, Wb).
    Chen's identity: S <- S (tensor) exp(delta), truncated at `depth`.
    """
    prev = jnp.zeros_like(points[0])
    sig = None
    for cur in points:
        delta = cur - prev
        prev = cur
        # exp(delta) terms: e[k-1] = delta^{(x)k} / k!
        e = [delta]
        for k in range(2, depth + 1):
            e.append(_outer(e[-1], delta) * (1.0 / k))
        if sig is None:
            sig = list(e)
        else:
            new_sig = []
            for k in range(1, depth + 1):
                acc = sig[k - 1] + e[k - 1]
                for j in range(1, k):
                    acc = acc + _outer(sig[j - 1], e[k - j - 1])
                new_sig.append(acc)
            sig = new_sig
    return sig


# ---------------------------------------------------------------------------
# Pallas kernel: time augmentation + signature recursion + linear projection
# over one tile of `block_w` windows (windows on the lane axis).
# ---------------------------------------------------------------------------
def _sig_linear_kernel(path_ref, w_ref, b_ref, out_ref, feat_ref, *,
                       win_size, depth, d):
    # path_ref: (win_size, C, block_w) VMEM      (raw window channels)
    # w_ref   : (out_dim, S)           VMEM      (nn.Linear weight, torch layout)
    # b_ref   : (out_dim, 1)           VMEM
    # out_ref : (out_dim, block_w)     VMEM      (lane-dense output)
    # feat_ref: (S, block_w)           VMEM scratch
    wb = out_ref.shape[-1]
    denom = float(max(win_size - 1, 1))

    points = []
    for t in range(win_size):
        # include_time=True: time channel is t/(win_size-1), same for all
        # windows -> generated in-kernel, never DMA'd.
        tv = jnp.full((1, wb), t / denom, dtype=jnp.float32)
        points.append(jnp.concatenate(
            [path_ref[t].astype(jnp.float32), tv], axis=0))   # (d, wb)

    sig = _chen_signature(points, depth)          # [(d**k, wb)]

    # Assemble signature levels at fixed sublane offsets of one scratch buffer.
    off = 0
    for k in range(1, depth + 1):
        size = d ** k
        feat_ref[off:off + size, :] = sig[k - 1]
        off += size

    out_ref[...] = (
        jnp.dot(w_ref[...], feat_ref[...], preferred_element_type=jnp.float32)
        + b_ref[...])


# ---------------------------------------------------------------------------
# Wrapper: padding, window extraction, W-on-lanes relayout, output reordering.
# ---------------------------------------------------------------------------
def sig_module_parallel_forward(x, w_lin, b_lin, *, win_size, sig_depth,
                                block_w_target=1024):
    """x: (N, C, J, T); w_lin: (out_dim, S) [torch nn.Linear layout];
    b_lin: (out_dim,).  Returns (N, out_dim, J, T)."""
    N, C, J, T = x.shape
    dt = (win_size - 1) // 2
    d = C + 1                                   # include_time=True
    W = J * T * N
    out_dim, S = w_lin.shape
    assert S == sum(d ** k for k in range(1, sig_depth + 1))

    # ReplicationPad2d((dt, dt, 0, 0)): pad the last (T) axis, edge replicate.
    x_pad = jnp.pad(x, ((0, 0), (0, 0), (0, 0), (dt, dt)), mode="edge")

    # Sliding windows along T; window index w = (i*T + j)*N + n.
    idx = jnp.arange(T)[:, None] + jnp.arange(win_size)[None, :]   # (T, win)
    win = x_pad[:, :, :, idx]                                      # (N, C, J, T, win)
    # path[t, c, w]: windows on the LAST (lane) axis.
    path = jnp.transpose(win, (4, 1, 2, 3, 0)).reshape(win_size, C, W)
    path = path.astype(jnp.float32)

    # Tail handling: pad W up to a multiple of block_w (a multiple of 128).
    W128 = _round_up(W, 128)
    g = _cdiv(W128, block_w_target)
    block_w = _round_up(_cdiv(W128, g), 128)
    W_pad = block_w * g
    if W_pad > W:
        path = jnp.pad(path, ((0, 0), (0, 0), (0, W_pad - W)))

    kernel = functools.partial(_sig_linear_kernel, win_size=win_size,
                               depth=sig_depth, d=d)

    out = pl.pallas_call(
        kernel,
        out_shape=jax.ShapeDtypeStruct((out_dim, W_pad), jnp.float32),
        grid_spec=pltpu.PrefetchScalarGridSpec(
            num_scalar_prefetch=0,
            grid=(g,),
            in_specs=[
                pl.BlockSpec((win_size, C, block_w), lambda i: (0, 0, i)),
                pl.BlockSpec((out_dim, S), lambda i: (0, 0)),
                pl.BlockSpec((out_dim, 1), lambda i: (0, 0)),
            ],
            out_specs=pl.BlockSpec((out_dim, block_w), lambda i: (0, i)),
            scratch_shapes=[pltpu.VMEM((S, block_w), jnp.float32)],
        ),
        compiler_params=pltpu.CompilerParams(
            dimension_semantics=("parallel",)),
    )(path, w_lin.astype(jnp.float32),
      b_lin.reshape(out_dim, 1).astype(jnp.float32))   # (out_dim, W_pad)

    # res[:, :, i, j] = feat[(i*T+j)*N : (i*T+j+1)*N]
    out = out[:, :W].reshape(out_dim, J, T, N)
    return jnp.transpose(out, (3, 0, 1, 2))            # (N, out_dim, J, T)


# ---------------------------------------------------------------------------
# Pure-JAX reference (independent outer-product implementation).
# ---------------------------------------------------------------------------
def _reference_forward(x, w_lin, b_lin, *, win_size, sig_depth):
    N, C, J, T = x.shape
    dt = (win_size - 1) // 2
    d = C + 1
    W = J * T * N
    out_dim = w_lin.shape[0]

    x_pad = jnp.pad(x, ((0, 0), (0, 0), (0, 0), (dt, dt)), mode="edge")
    idx = jnp.arange(T)[:, None] + jnp.arange(win_size)[None, :]
    win = jnp.transpose(x_pad[:, :, :, idx], (2, 3, 0, 4, 1)).reshape(W, win_size, C)
    time = jnp.broadcast_to(
        jnp.linspace(0.0, 1.0, win_size, dtype=jnp.float32)[None, :, None],
        (W, win_size, 1))
    path = jnp.concatenate([win.astype(jnp.float32), time], axis=-1)  # (W, win, d)

    def outer3(a, b):
        return (a[:, :, None] * b[:, None, :]).reshape(a.shape[0], -1)

    prev = jnp.zeros((W, d), dtype=jnp.float32)
    sig = None
    for t in range(win_size):
        cur = path[:, t, :]
        delta = cur - prev
        prev = cur
        e = [delta]
        for k in range(2, sig_depth + 1):
            e.append(outer3(e[-1], delta) / float(k))
        if sig is None:
            sig = list(e)
        else:
            new_sig = []
            for k in range(1, sig_depth + 1):
                acc = sig[k - 1] + e[k - 1]
                for j in range(1, k):
                    acc = acc + outer3(sig[j - 1], e[k - j - 1])
                new_sig.append(acc)
            sig = new_sig
    feat = jnp.concatenate(sig, axis=-1)                              # (W, S)
    out = jnp.dot(feat, w_lin.T,
                  precision=jax.lax.Precision.HIGHEST) + b_lin[None, :]
    out = out.reshape(J, T, N, out_dim)
    return jnp.transpose(out, (2, 3, 0, 1))


# ---------------------------------------------------------------------------
if __name__ == "__main__":
    # Small shapes consistent with the module (in_channels == sig_in_channels
    # since use_bottleneck=False).  W = J*T*N = 200, which exercises both tail
    # padding and a grid > 1 (with the small test block target of 128).
    N, C, J, T = 2, 4, 5, 20
    win_size = 5
    sig_depth = 2
    out_dim = 8
    d = C + 1
    sig_channels = sum(d ** k for k in range(1, sig_depth + 1))   # 5 + 25 = 30

    key = jax.random.PRNGKey(0)
    kx, kw, kb = jax.random.split(key, 3)
    x = jax.random.normal(kx, (N, C, J, T), dtype=jnp.float32)
    # nn.Linear(sig_channels, out_dim): weight (out_dim, sig_channels), bias (out_dim,)
    w_lin = jax.random.normal(kw, (out_dim, sig_channels), dtype=jnp.float32)
    w_lin = w_lin / jnp.sqrt(jnp.float32(sig_channels))
    b_lin = 0.01 * jax.random.normal(kb, (out_dim,), dtype=jnp.float32)

    out = sig_module_parallel_forward(
        x, w_lin, b_lin, win_size=win_size, sig_depth=sig_depth,
        block_w_target=128)   # small target for the test -> grid = 2
    out = jax.block_until_ready(out)

    ref = _reference_forward(
        x, w_lin, b_lin, win_size=win_size, sig_depth=sig_depth)
    ref = jax.block_until_ready(ref)

    assert out.shape == (N, out_dim, J, T), out.shape
    # The in-kernel linear layer runs at default (bf16-pass) MXU precision
    # while the reference uses Precision.HIGHEST -> looser tolerance.
    if not bool(jnp.allclose(out, ref, rtol=2e-2, atol=2e-2)):
        raise SystemExit("Pallas kernel output does not match reference")
    print("KERNEL_OK")
</pallas_src>

<mosaic_0001>
module attributes {stable_mosaic.version = 11 : i64} {
  func.func @_sig_linear_kernel(%arg0: i32, %arg1: memref<5x4x128xf32, #tpu.memory_space<vmem>>, %arg2: memref<8x30xf32, #tpu.memory_space<vmem>>, %arg3: memref<8x1xf32, #tpu.memory_space<vmem>>, %arg4: memref<8x128xf32, #tpu.memory_space<vmem>>, %arg5: memref<30x128xf32, #tpu.memory_space<vmem>>) attributes {dimension_semantics = [#tpu.dimension_semantics<parallel>], iteration_bounds = array<i64: 2>, scalar_prefetch = 0 : i64, scratch_operands = 1 : i64, tpu.core_type = #tpu.core_type<tc>, window_params = [{transform_indices = @transform_0, window_bounds = array<i64: 5, 4, 128>}, {pipeline_mode = #tpu.pipeline_mode<synchronous>, transform_indices = @transform_1, window_bounds = array<i64: 8, 30>}, {pipeline_mode = #tpu.pipeline_mode<synchronous>, transform_indices = @transform_2, window_bounds = array<i64: 8, 1>}, {transform_indices = @transform_3, window_bounds = array<i64: 8, 128>}]} {
    %cst = arith.constant 0.000000e+00 : f32
    %0 = vector.broadcast %cst : f32 to vector<1x128xf32>
    %c0 = arith.constant 0 : index
    %c0_0 = arith.constant 0 : index
    %c0_1 = arith.constant 0 : index
    %1 = vector.load %arg1[%c0, %c0_0, %c0_1] : memref<5x4x128xf32, #tpu.memory_space<vmem>>, vector<1x4x128xf32>
    %2 = vector.shape_cast %1 : vector<1x4x128xf32> to vector<4x128xf32>
    %3 = tpu.concatenate %2, %0 in 0 : vector<4x128xf32>, vector<1x128xf32> -> vector<5x128xf32>
    %cst_2 = arith.constant 2.500000e-01 : f32
    %4 = vector.broadcast %cst_2 : f32 to vector<1x128xf32>
    %c1 = arith.constant 1 : index
    %c0_3 = arith.constant 0 : index
    %c0_4 = arith.constant 0 : index
    %5 = vector.load %arg1[%c1, %c0_3, %c0_4] : memref<5x4x128xf32, #tpu.memory_space<vmem>>, vector<1x4x128xf32>
    %6 = vector.shape_cast %5 : vector<1x4x128xf32> to vector<4x128xf32>
    %7 = tpu.concatenate %6, %4 in 0 : vector<4x128xf32>, vector<1x128xf32> -> vector<5x128xf32>
    %cst_5 = arith.constant 5.000000e-01 : f32
    %8 = vector.broadcast %cst_5 : f32 to vector<1x128xf32>
    %c2 = arith.constant 2 : index
    %c0_6 = arith.constant 0 : index
    %c0_7 = arith.constant 0 : index
    %9 = vector.load %arg1[%c2, %c0_6, %c0_7] : memref<5x4x128xf32, #tpu.memory_space<vmem>>, vector<1x4x128xf32>
    %10 = vector.shape_cast %9 : vector<1x4x128xf32> to vector<4x128xf32>
    %11 = tpu.concatenate %10, %8 in 0 : vector<4x128xf32>, vector<1x128xf32> -> vector<5x128xf32>
    %cst_8 = arith.constant 7.500000e-01 : f32
    %12 = vector.broadcast %cst_8 : f32 to vector<1x128xf32>
    %c3 = arith.constant 3 : index
    %c0_9 = arith.constant 0 : index
    %c0_10 = arith.constant 0 : index
    %13 = vector.load %arg1[%c3, %c0_9, %c0_10] : memref<5x4x128xf32, #tpu.memory_space<vmem>>, vector<1x4x128xf32>
    %14 = vector.shape_cast %13 : vector<1x4x128xf32> to vector<4x128xf32>
    %15 = tpu.concatenate %14, %12 in 0 : vector<4x128xf32>, vector<1x128xf32> -> vector<5x128xf32>
    %cst_11 = arith.constant 1.000000e+00 : f32
    %16 = vector.broadcast %cst_11 : f32 to vector<1x128xf32>
    %c4 = arith.constant 4 : index
    %c0_12 = arith.constant 0 : index
    %c0_13 = arith.constant 0 : index
    %17 = vector.load %arg1[%c4, %c0_12, %c0_13] : memref<5x4x128xf32, #tpu.memory_space<vmem>>, vector<1x4x128xf32>
    %18 = vector.shape_cast %17 : vector<1x4x128xf32> to vector<4x128xf32>
    %19 = tpu.concatenate %18, %16 in 0 : vector<4x128xf32>, vector<1x128xf32> -> vector<5x128xf32>
    %cst_14 = arith.constant 0.000000e+00 : f32
    %20 = vector.broadcast %cst_14 : f32 to vector<5x128xf32>
    %21 = arith.subf %3, %20 : vector<5x128xf32>
    %22 = vector.extract_strided_slice %21 {offsets = [0, 0], sizes = [1, 128], strides = [1, 1]} : vector<5x128xf32> to vector<1x128xf32>
    %23 = vector.broadcast %22 : vector<1x128xf32> to vector<5x128xf32>
    %24 = arith.mulf %23, %21 : vector<5x128xf32>
    %25 = vector.extract_strided_slice %21 {offsets = [1, 0], sizes = [1, 128], strides = [1, 1]} : vector<5x128xf32> to vector<1x128xf32>
    %26 = vector.broadcast %25 : vector<1x128xf32> to vector<5x128xf32>
    %27 = arith.mulf %26, %21 : vector<5x128xf32>
    %28 = vector.extract_strided_slice %21 {offsets = [2, 0], sizes = [1, 128], strides = [1, 1]} : vector<5x128xf32> to vector<1x128xf32>
    %29 = vector.broadcast %28 : vector<1x128xf32> to vector<5x128xf32>
    %30 = arith.mulf %29, %21 : vector<5x128xf32>
    %31 = vector.extract_strided_slice %21 {offsets = [3, 0], sizes = [1, 128], strides = [1, 1]} : vector<5x128xf32> to vector<1x128xf32>
    %32 = vector.broadcast %31 : vector<1x128xf32> to vector<5x128xf32>
    %33 = arith.mulf %32, %21 : vector<5x128xf32>
    %34 = vector.extract_strided_slice %21 {offsets = [4, 0], sizes = [1, 128], strides = [1, 1]} : vector<5x128xf32> to vector<1x128xf32>
    %35 = vector.broadcast %34 : vector<1x128xf32> to vector<5x128xf32>
    %36 = arith.mulf %35, %21 : vector<5x128xf32>
    %37 = tpu.concatenate %24, %27, %30, %33, %36 in 0 : vector<5x128xf32>, vector<5x128xf32>, vector<5x128xf32>, vector<5x128xf32>, vector<5x128xf32> -> vector<25x128xf32>
    %cst_15 = arith.constant 5.000000e-01 : f32
    %38 = vector.broadcast %cst_15 : f32 to vector<25x128xf32>
    %39 = arith.mulf %37, %38 : vector<25x128xf32>
    %40 = arith.subf %7, %3 : vector<5x128xf32>
    %41 = vector.extract_strided_slice %40 {offsets = [0, 0], sizes = [1, 128], strides = [1, 1]} : vector<5x128xf32> to vector<1x128xf32>
    %42 = vector.broadcast %41 : vector<1x128xf32> to vector<5x128xf32>
    %43 = arith.mulf %42, %40 : vector<5x128xf32>
    %44 = vector.extract_strided_slice %40 {offsets = [1, 0], sizes = [1, 128], strides = [1, 1]} : vector<5x128xf32> to vector<1x128xf32>
    %45 = vector.broadcast %44 : vector<1x128xf32> to vector<5x128xf32>
    %46 = arith.mulf %45, %40 : vector<5x128xf32>
    %47 = vector.extract_strided_slice %40 {offsets = [2, 0], sizes = [1, 128], strides = [1, 1]} : vector<5x128xf32> to vector<1x128xf32>
    %48 = vector.broadcast %47 : vector<1x128xf32> to vector<5x128xf32>
    %49 = arith.mulf %48, %40 : vector<5x128xf32>
    %50 = vector.extract_strided_slice %40 {offsets = [3, 0], sizes = [1, 128], strides = [1, 1]} : vector<5x128xf32> to vector<1x128xf32>
    %51 = vector.broadcast %50 : vector<1x128xf32> to vector<5x128xf32>
    %52 = arith.mulf %51, %40 : vector<5x128xf32>
    %53 = vector.extract_strided_slice %40 {offsets = [4, 0], sizes = [1, 128], strides = [1, 1]} : vector<5x128xf32> to vector<1x128xf32>
    %54 = vector.broadcast %53 : vector<1x128xf32> to vector<5x128xf32>
    %55 = arith.mulf %54, %40 : vector<5x128xf32>
    %56 = tpu.concatenate %43, %46, %49, %52, %55 in 0 : vector<5x128xf32>, vector<5x128xf32>, vector<5x128xf32>, vector<5x128xf32>, vector<5x128xf32> -> vector<25x128xf32>
    %cst_16 = arith.constant 5.000000e-01 : f32
    %57 = vector.broadcast %cst_16 : f32 to vector<25x128xf32>
    %58 = arith.mulf %56, %57 : vector<25x128xf32>
    %59 = arith.addf %21, %40 : vector<5x128xf32>
    %60 = arith.addf %39, %58 : vector<25x128xf32>
    %61 = vector.extract_strided_slice %21 {offsets = [0, 0], sizes = [1, 128], strides = [1, 1]} : vector<5x128xf32> to vector<1x128xf32>
    %62 = vector.broadcast %61 : vector<1x128xf32> to vector<5x128xf32>
    %63 = arith.mulf %62, %40 : vector<5x128xf32>
    %64 = vector.extract_strided_slice %21 {offsets = [1, 0], sizes = [1, 128], strides = [1, 1]} : vector<5x128xf32> to vector<1x128xf32>
    %65 = vector.broadcast %64 : vector<1x128xf32> to vector<5x128xf32>
    %66 = arith.mulf %65, %40 : vector<5x128xf32>
    %67 = vector.extract_strided_slice %21 {offsets = [2, 0], sizes = [1, 128], strides = [1, 1]} : vector<5x128xf32> to vector<1x128xf32>
    %68 = vector.broadcast %67 : vector<1x128xf32> to vector<5x128xf32>
    %69 = arith.mulf %68, %40 : vector<5x128xf32>
    %70 = vector.extract_strided_slice %21 {offsets = [3, 0], sizes = [1, 128], strides = [1, 1]} : vector<5x128xf32> to vector<1x128xf32>
    %71 = vector.broadcast %70 : vector<1x128xf32> to vector<5x128xf32>
    %72 = arith.mulf %71, %40 : vector<5x128xf32>
    %73 = vector.extract_strided_slice %21 {offsets = [4, 0], sizes = [1, 128], strides = [1, 1]} : vector<5x128xf32> to vector<1x128xf32>
    %74 = vector.broadcast %73 : vector<1x128xf32> to vector<5x128xf32>
    %75 = arith.mulf %74, %40 : vector<5x128xf32>
    %76 = tpu.concatenate %63, %66, %69, %72, %75 in 0 : vector<5x128xf32>, vector<5x128xf32>, vector<5x128xf32>, vector<5x128xf32>, vector<5x128xf32> -> vector<25x128xf32>
    %77 = arith.addf %60, %76 : vector<25x128xf32>
    %78 = arith.subf %11, %7 : vector<5x128xf32>
    %79 = vector.extract_strided_slice %78 {offsets = [0, 0], sizes = [1, 128], strides = [1, 1]} : vector<5x128xf32> to vector<1x128xf32>
    %80 = vector.broadcast %79 : vector<1x128xf32> to vector<5x128xf32>
    %81 = arith.mulf %80, %78 : vector<5x128xf32>
    %82 = vector.extract_strided_slice %78 {offsets = [1, 0], sizes = [1, 128], strides = [1, 1]} : vector<5x128xf32> to vector<1x128xf32>
    %83 = vector.broadcast %82 : vector<1x128xf32> to vector<5x128xf32>
    %84 = arith.mulf %83, %78 : vector<5x128xf32>
    %85 = vector.extract_strided_slice %78 {offsets = [2, 0], sizes = [1, 128], strides = [1, 1]} : vector<5x128xf32> to vector<1x128xf32>
    %86 = vector.broadcast %85 : vector<1x128xf32> to vector<5x128xf32>
    %87 = arith.mulf %86, %78 : vector<5x128xf32>
    %88 = vector.extract_strided_slice %78 {offsets = [3, 0], sizes = [1, 128], strides = [1, 1]} : vector<5x128xf32> to vector<1x128xf32>
    %89 = vector.broadcast %88 : vector<1x128xf32> to vector<5x128xf32>
    %90 = arith.mulf %89, %78 : vector<5x128xf32>
    %91 = vector.extract_strided_slice %78 {offsets = [4, 0], sizes = [1, 128], strides = [1, 1]} : vector<5x128xf32> to vector<1x128xf32>
    %92 = vector.broadcast %91 : vector<1x128xf32> to vector<5x128xf32>
    %93 = arith.mulf %92, %78 : vector<5x128xf32>
    %94 = tpu.concatenate %81, %84, %87, %90, %93 in 0 : vector<5x128xf32>, vector<5x128xf32>, vector<5x128xf32>, vector<5x128xf32>, vector<5x128xf32> -> vector<25x128xf32>
    %cst_17 = arith.constant 5.000000e-01 : f32
    %95 = vector.broadcast %cst_17 : f32 to vector<25x128xf32>
    %96 = arith.mulf %94, %95 : vector<25x128xf32>
    %97 = arith.addf %59, %78 : vector<5x128xf32>
    %98 = arith.addf %77, %96 : vector<25x128xf32>
    %99 = vector.extract_strided_slice %59 {offsets = [0, 0], sizes = [1, 128], strides = [1, 1]} : vector<5x128xf32> to vector<1x128xf32>
    %100 = vector.broadcast %99 : vector<1x128xf32> to vector<5x128xf32>
    %101 = arith.mulf %100, %78 : vector<5x128xf32>
    %102 = vector.extract_strided_slice %59 {offsets = [1, 0], sizes = [1, 128], strides = [1, 1]} : vector<5x128xf32> to vector<1x128xf32>
    %103 = vector.broadcast %102 : vector<1x128xf32> to vector<5x128xf32>
    %104 = arith.mulf %103, %78 : vector<5x128xf32>
    %105 = vector.extract_strided_slice %59 {offsets = [2, 0], sizes = [1, 128], strides = [1, 1]} : vector<5x128xf32> to vector<1x128xf32>
    %106 = vector.broadcast %105 : vector<1x128xf32> to vector<5x128xf32>
    %107 = arith.mulf %106, %78 : vector<5x128xf32>
    %108 = vector.extract_strided_slice %59 {offsets = [3, 0], sizes = [1, 128], strides = [1, 1]} : vector<5x128xf32> to vector<1x128xf32>
    %109 = vector.broadcast %108 : vector<1x128xf32> to vector<5x128xf32>
    %110 = arith.mulf %109, %78 : vector<5x128xf32>
    %111 = vector.extract_strided_slice %59 {offsets = [4, 0], sizes = [1, 128], strides = [1, 1]} : vector<5x128xf32> to vector<1x128xf32>
    %112 = vector.broadcast %111 : vector<1x128xf32> to vector<5x128xf32>
    %113 = arith.mulf %112, %78 : vector<5x128xf32>
    %114 = tpu.concatenate %101, %104, %107, %110, %113 in 0 : vector<5x128xf32>, vector<5x128xf32>, vector<5x128xf32>, vector<5x128xf32>, vector<5x128xf32> -> vector<25x128xf32>
    %115 = arith.addf %98, %114 : vector<25x128xf32>
    %116 = arith.subf %15, %11 : vector<5x128xf32>
    %117 = vector.extract_strided_slice %116 {offsets = [0, 0], sizes = [1, 128], strides = [1, 1]} : vector<5x128xf32> to vector<1x128xf32>
    %118 = vector.broadcast %117 : vector<1x128xf32> to vector<5x128xf32>
    %119 = arith.mulf %118, %116 : vector<5x128xf32>
    %120 = vector.extract_strided_slice %116 {offsets = [1, 0], sizes = [1, 128], strides = [1, 1]} : vector<5x128xf32> to vector<1x128xf32>
    %121 = vector.broadcast %120 : vector<1x128xf32> to vector<5x128xf32>
    %122 = arith.mulf %121, %116 : vector<5x128xf32>
    %123 = vector.extract_strided_slice %116 {offsets = [2, 0], sizes = [1, 128], strides = [1, 1]} : vector<5x128xf32> to vector<1x128xf32>
    %124 = vector.broadcast %123 : vector<1x128xf32> to vector<5x128xf32>
    %125 = arith.mulf %124, %116 : vector<5x128xf32>
    %126 = vector.extract_strided_slice %116 {offsets = [3, 0], sizes = [1, 128], strides = [1, 1]} : vector<5x128xf32> to vector<1x128xf32>
    %127 = vector.broadcast %126 : vector<1x128xf32> to vector<5x128xf32>
    %128 = arith.mulf %127, %116 : vector<5x128xf32>
    %129 = vector.extract_strided_slice %116 {offsets = [4, 0], sizes = [1, 128], strides = [1, 1]} : vector<5x128xf32> to vector<1x128xf32>
    %130 = vector.broadcast %129 : vector<1x128xf32> to vector<5x128xf32>
    %131 = arith.mulf %130, %116 : vector<5x128xf32>
    %132 = tpu.concatenate %119, %122, %125, %128, %131 in 0 : vector<5x128xf32>, vector<5x128xf32>, vector<5x128xf32>, vector<5x128xf32>, vector<5x128xf32> -> vector<25x128xf32>
    %cst_18 = arith.constant 5.000000e-01 : f32
    %133 = vector.broadcast %cst_18 : f32 to vector<25x128xf32>
    %134 = arith.mulf %132, %133 : vector<25x128xf32>
    %135 = arith.addf %97, %116 : vector<5x128xf32>
    %136 = arith.addf %115, %134 : vector<25x128xf32>
    %137 = vector.extract_strided_slice %97 {offsets = [0, 0], sizes = [1, 128], strides = [1, 1]} : vector<5x128xf32> to vector<1x128xf32>
    %138 = vector.broadcast %137 : vector<1x128xf32> to vector<5x128xf32>
    %139 = arith.mulf %138, %116 : vector<5x128xf32>
    %140 = vector.extract_strided_slice %97 {offsets = [1, 0], sizes = [1, 128], strides = [1, 1]} : vector<5x128xf32> to vector<1x128xf32>
    %141 = vector.broadcast %140 : vector<1x128xf32> to vector<5x128xf32>
    %142 = arith.mulf %141, %116 : vector<5x128xf32>
    %143 = vector.extract_strided_slice %97 {offsets = [2, 0], sizes = [1, 128], strides = [1, 1]} : vector<5x128xf32> to vector<1x128xf32>
    %144 = vector.broadcast %143 : vector<1x128xf32> to vector<5x128xf32>
    %145 = arith.mulf %144, %116 : vector<5x128xf32>
    %146 = vector.extract_strided_slice %97 {offsets = [3, 0], sizes = [1, 128], strides = [1, 1]} : vector<5x128xf32> to vector<1x128xf32>
    %147 = vector.broadcast %146 : vector<1x128xf32> to vector<5x128xf32>
    %148 = arith.mulf %147, %116 : vector<5x128xf32>
    %149 = vector.extract_strided_slice %97 {offsets = [4, 0], sizes = [1, 128], strides = [1, 1]} : vector<5x128xf32> to vector<1x128xf32>
    %150 = vector.broadcast %149 : vector<1x128xf32> to vector<5x128xf32>
    %151 = arith.mulf %150, %116 : vector<5x128xf32>
    %152 = tpu.concatenate %139, %142, %145, %148, %151 in 0 : vector<5x128xf32>, vector<5x128xf32>, vector<5x128xf32>, vector<5x128xf32>, vector<5x128xf32> -> vector<25x128xf32>
    %153 = arith.addf %136, %152 : vector<25x128xf32>
    %154 = arith.subf %19, %15 : vector<5x128xf32>
    %155 = vector.extract_strided_slice %154 {offsets = [0, 0], sizes = [1, 128], strides = [1, 1]} : vector<5x128xf32> to vector<1x128xf32>
    %156 = vector.broadcast %155 : vector<1x128xf32> to vector<5x128xf32>
    %157 = arith.mulf %156, %154 : vector<5x128xf32>
    %158 = vector.extract_strided_slice %154 {offsets = [1, 0], sizes = [1, 128], strides = [1, 1]} : vector<5x128xf32> to vector<1x128xf32>
    %159 = vector.broadcast %158 : vector<1x128xf32> to vector<5x128xf32>
    %160 = arith.mulf %159, %154 : vector<5x128xf32>
    %161 = vector.extract_strided_slice %154 {offsets = [2, 0], sizes = [1, 128], strides = [1, 1]} : vector<5x128xf32> to vector<1x128xf32>
    %162 = vector.broadcast %161 : vector<1x128xf32> to vector<5x128xf32>
    %163 = arith.mulf %162, %154 : vector<5x128xf32>
    %164 = vector.extract_strided_slice %154 {offsets = [3, 0], sizes = [1, 128], strides = [1, 1]} : vector<5x128xf32> to vector<1x128xf32>
    %165 = vector.broadcast %164 : vector<1x128xf32> to vector<5x128xf32>
    %166 = arith.mulf %165, %154 : vector<5x128xf32>
    %167 = vector.extract_strided_slice %154 {offsets = [4, 0], sizes = [1, 128], strides = [1, 1]} : vector<5x128xf32> to vector<1x128xf32>
    %168 = vector.broadcast %167 : vector<1x128xf32> to vector<5x128xf32>
    %169 = arith.mulf %168, %154 : vector<5x128xf32>
    %170 = tpu.concatenate %157, %160, %163, %166, %169 in 0 : vector<5x128xf32>, vector<5x128xf32>, vector<5x128xf32>, vector<5x128xf32>, vector<5x128xf32> -> vector<25x128xf32>
    %cst_19 = arith.constant 5.000000e-01 : f32
    %171 = vector.broadcast %cst_19 : f32 to vector<25x128xf32>
    %172 = arith.mulf %170, %171 : vector<25x128xf32>
    %173 = arith.addf %135, %154 : vector<5x128xf32>
    %174 = arith.addf %153, %172 : vector<25x128xf32>
    %175 = vector.extract_strided_slice %135 {offsets = [0, 0], sizes = [1, 128], strides = [1, 1]} : vector<5x128xf32> to vector<1x128xf32>
    %176 = vector.broadcast %175 : vector<1x128xf32> to vector<5x128xf32>
    %177 = arith.mulf %176, %154 : vector<5x128xf32>
    %178 = vector.extract_strided_slice %135 {offsets = [1, 0], sizes = [1, 128], strides = [1, 1]} : vector<5x128xf32> to vector<1x128xf32>
    %179 = vector.broadcast %178 : vector<1x128xf32> to vector<5x128xf32>
    %180 = arith.mulf %179, %154 : vector<5x128xf32>
    %181 = vector.extract_strided_slice %135 {offsets = [2, 0], sizes = [1, 128], strides = [1, 1]} : vector<5x128xf32> to vector<1x128xf32>
    %182 = vector.broadcast %181 : vector<1x128xf32> to vector<5x128xf32>
    %183 = arith.mulf %182, %154 : vector<5x128xf32>
    %184 = vector.extract_strided_slice %135 {offsets = [3, 0], sizes = [1, 128], strides = [1, 1]} : vector<5x128xf32> to vector<1x128xf32>
    %185 = vector.broadcast %184 : vector<1x128xf32> to vector<5x128xf32>
    %186 = arith.mulf %185, %154 : vector<5x128xf32>
    %187 = vector.extract_strided_slice %135 {offsets = [4, 0], sizes = [1, 128], strides = [1, 1]} : vector<5x128xf32> to vector<1x128xf32>
    %188 = vector.broadcast %187 : vector<1x128xf32> to vector<5x128xf32>
    %189 = arith.mulf %188, %154 : vector<5x128xf32>
    %190 = tpu.concatenate %177, %180, %183, %186, %189 in 0 : vector<5x128xf32>, vector<5x128xf32>, vector<5x128xf32>, vector<5x128xf32>, vector<5x128xf32> -> vector<25x128xf32>
    %191 = arith.addf %174, %190 : vector<25x128xf32>
    %c0_20 = arith.constant 0 : index
    %c0_21 = arith.constant 0 : index
    %192 = vector.load %arg5[%c0_20, %c0_21] : memref<30x128xf32, #tpu.memory_space<vmem>>, vector<5x128xf32>
    tpu.vector_store %arg5[%c0_20, %c0_21], %173 {strides = array<i32>} : memref<30x128xf32, #tpu.memory_space<vmem>>, vector<5x128xf32>,
    %c5 = arith.constant 5 : index
    %c0_22 = arith.constant 0 : index
    %193 = vector.load %arg5[%c5, %c0_22] : memref<30x128xf32, #tpu.memory_space<vmem>>, vector<25x128xf32>
    tpu.vector_store %arg5[%c5, %c0_22], %191 {strides = array<i32>} : memref<30x128xf32, #tpu.memory_space<vmem>>, vector<25x128xf32>,
    %c0_23 = arith.constant 0 : index
    %c0_24 = arith.constant 0 : index
    %194 = vector.load %arg2[%c0_23, %c0_24] : memref<8x30xf32, #tpu.memory_space<vmem>>, vector<8x30xf32>
    %c0_25 = arith.constant 0 : index
    %c0_26 = arith.constant 0 : index
    %195 = vector.load %arg5[%c0_25, %c0_26] : memref<30x128xf32, #tpu.memory_space<vmem>>, vector<30x128xf32>
    %cst_27 = arith.constant dense<0.000000e+00> : vector<8x128xf32>
    %196 = tpu.matmul %194, %195, %cst_27 {dimension_numbers = #tpu.dot_dimension_numbers<[1], [0], [0], [1], [0, 0, 1, 1], [], []>} : vector<8x30xf32>, vector<30x128xf32>, vector<8x128xf32> -> vector<8x128xf32>
    %c0_28 = arith.constant 0 : index
    %c0_29 = arith.constant 0 : index
    %197 = vector.load %arg3[%c0_28, %c0_29] : memref<8x1xf32, #tpu.memory_space<vmem>>, vector<8x1xf32>
    %198 = vector.broadcast %197 : vector<8x1xf32> to vector<8x128xf32>
    %199 = arith.addf %196, %198 : vector<8x128xf32>
    %c0_30 = arith.constant 0 : index
    %c0_31 = arith.constant 0 : index
    %200 = vector.load %arg4[%c0_30, %c0_31] : memref<8x128xf32, #tpu.memory_space<vmem>>, vector<8x128xf32>
    tpu.vector_store %arg4[%c0_30, %c0_31], %199 {strides = array<i32>} : memref<8x128xf32, #tpu.memory_space<vmem>>, vector<8x128xf32>,
    return
  }
  func.func @transform_0(%arg0: i32) -> (i32, i32, i32) {
    %c0_i32 = arith.constant 0 : i32
    %c0_i32_0 = arith.constant 0 : i32
    %c0_i32_1 = arith.constant 0 : i32
    return %c0_i32, %c0_i32_0, %arg0 : i32, i32, i32
  }
  func.func @transform_1(%arg0: i32) -> (i32, i32) {
    %c0_i32 = arith.constant 0 : i32
    %c0_i32_0 = arith.constant 0 : i32
    %c0_i32_1 = arith.constant 0 : i32
    return %c0_i32, %c0_i32_0 : i32, i32
  }
  func.func @transform_2(%arg0: i32) -> (i32, i32) {
    %c0_i32 = arith.constant 0 : i32
    %c0_i32_0 = arith.constant 0 : i32
    %c0_i32_1 = arith.constant 0 : i32
    return %c0_i32, %c0_i32_0 : i32, i32
  }
  func.func @transform_3(%arg0: i32) -> (i32, i32) {
    %c0_i32 = arith.constant 0 : i32
    %c0_i32_0 = arith.constant 0 : i32
    return %c0_i32, %arg0 : i32, i32
  }
}

</mosaic_0001>

<llo_original>
// kernel: tpu_custom_call.1
$region0: #{tpu_custom_call.1}
  #allocation0 [shape = 'u32[]', space=smem, size = 0x4, offset = 0x4, fixed_abs, tag = 'smem constant byte address 0x4 - core index']
  #allocation1 [shape = 'u32[144,128]{1,0:T(1,128)}', space=vmem, size = 0x12000, scoped, tag = 'internal scratch']
  #allocation2 [shape = 'f32[30,128]{1,0:T(8,128)}', space=vmem, size = 0x4000, scoped, tag = 'scratch operand']
  %s0 = inlined_call_operand.hbm [shape: f32[5,4,256], index: 0, kind: input, shape index: {}]
  %s1 = inlined_call_operand.vmem [shape: f32[8,30], index: 1, kind: input, shape index: {}]
  %s2 = inlined_call_operand.vmem [shape: f32[8,1], index: 2, kind: input, shape index: {}]
  %s3 = inlined_call_operand.hbm [shape: f32[8,256], index: 3, kind: output, shape index: {}]
  %s4 = sld [smem:[#allocation0]]
  $region49: #{tpu_custom_call.1} parent=0
    _
  %s6 = ssub.s32 1, %s4
  %s7 = scalar_select 0, %s6, %s4
  $region1: #{tpu_custom_call.1} parent=0
    #allocation3 [shape = 'u8[20480]{0}', space=vmem, size = 0x5000, scoped, tag = 'input window, operand 0']
    #allocation4 [shape = 's32[2]{0}', space=sflag, size = 0x8, scoped, tag = 'scoped memory for tpu_custom_call.1']
    #allocation5 [shape = 's32[2]{0}', space=sflag, size = 0x8, scoped, tag = 'scoped memory for tpu_custom_call.1']
    #allocation6 [shape = 'u8[8192]{0}', space=vmem, size = 0x2000, scoped, tag = 'output window, operand 0']
    %8 = vsyncpa [#allocation4], 0
    %s9 = scalar_lea.sflag [#allocation4], 1
    %10 = vsyncpa %s9, 0
    %11 = vsyncpa [#allocation5], 0
    %s12 = scalar_lea.sflag [#allocation5], 1
    %13 = vsyncpa %s12, 0
    loop: start=0, step=1, limit=4
    $region2: #{tpu_custom_call.1} parent=1 // loop_pre_header
      _
    $region3: #{tpu_custom_call.1} parent=1 // loop_header
      %s15 = sphi 0, %s19
      %p16 = scmp.ge.s32.totalorder %s15, 4
      %s25 = sphi 0, %s27
      %s28 = sphi 0, %s25
      %s29 = sphi 0, %s28
      %s45 = sphi 0, %s29
      %s49 = sphi 0, %s49
      %s51 = sphi 0, %s49
      %s52 = sphi 0, %s51
      %s66 = sphi 0, %s52
      %s70 = sphi 0, %s70
      %s72 = sphi 0, %s70
      %s73 = sphi 0, %s72
      %s87 = sphi 0, %s73
      %s93 = sphi 0, %s95
      %s96 = sphi 0, %s93
      %s97 = sphi 0, %s96
      %s113 = sphi 0, %s97
    $region4: #{tpu_custom_call.1} parent=1 // loop_header_branch
      %18 = sbr.rel (%p16) target = $region8
    $region5: #{tpu_custom_call.1} parent=1 // loop_body
      %s20 = ssub.s32 %s15, 1
      %s21 = ssub.s32 %s15, 2
      %s22 = sadd.s32 %s15, 1
      %s23 = ssub.s32 %s15, %s22
      %p24 = scmp.eq.s32.totalorder %s23, 0
      %s26 = sadd.s32 %s25, 1
      %s27 = scalar_select %p24, %s25, %s26
      %p30 = pneg %p24
      %p31 = scmp.eq.s32.totalorder %s15, 1
      %p32 = por %p30, %p31
      %p33 = scmp.ne.s32.totalorder %s25, %s28
      %p34 = scmp.eq.s32.totalorder %s15, 0
      %p35 = por %p33, %p34
      %p36 = scmp.ne.s32.totalorder %s25, %s28
      %p37 = scmp.eq.s32.totalorder %s20, 1
      %p38 = por %p36, %p37
      %p39 = scmp.ne.s32.totalorder %s28, %s29
      %p40 = scmp.eq.s32.totalorder %s20, 0
      %p41 = por %p39, %p40
      %p42 = scmp.ne.s32.totalorder %s28, %s29
      %p43 = scmp.eq.s32.totalorder %s21, 1
      %p44 = por %p42, %p43
      %p46 = scmp.ne.s32.totalorder %s29, %s45
      %p47 = scmp.eq.s32.totalorder %s21, 0
      %p48 = por %p46, %p47
      %s50 = sadd.s32 %s49, 1
      %p53 = scmp.eq.s32.totalorder %s15, 1
      %p54 = scmp.ne.s32.totalorder %s49, %s51
      %p55 = scmp.eq.s32.totalorder %s15, 0
      %p56 = por %p54, %p55
      %p57 = scmp.ne.s32.totalorder %s49, %s51
      %p58 = scmp.eq.s32.totalorder %s20, 1
      %p59 = por %p57, %p58
      %p60 = scmp.ne.s32.totalorder %s51, %s52
      %p61 = scmp.eq.s32.totalorder %s20, 0
      %p62 = por %p60, %p61
      %p63 = scmp.ne.s32.totalorder %s51, %s52
      %p64 = scmp.eq.s32.totalorder %s21, 1
      %p65 = por %p63, %p64
      %p67 = scmp.ne.s32.totalorder %s52, %s66
      %p68 = scmp.eq.s32.totalorder %s21, 0
      %p69 = por %p67, %p68
      %s71 = sadd.s32 %s70, 1
      %p74 = scmp.eq.s32.totalorder %s15, 1
      %p75 = scmp.ne.s32.totalorder %s70, %s72
      %p76 = scmp.eq.s32.totalorder %s15, 0
      %p77 = por %p75, %p76
      %p78 = scmp.ne.s32.totalorder %s70, %s72
      %p79 = scmp.eq.s32.totalorder %s20, 1
      %p80 = por %p78, %p79
      %p81 = scmp.ne.s32.totalorder %s72, %s73
      %p82 = scmp.eq.s32.totalorder %s20, 0
      %p83 = por %p81, %p82
      %p84 = scmp.ne.s32.totalorder %s72, %s73
      %p85 = scmp.eq.s32.totalorder %s21, 1
      %p86 = por %p84, %p85
      %p88 = scmp.ne.s32.totalorder %s73, %s87
      %p89 = scmp.eq.s32.totalorder %s21, 0
      %p90 = por %p88, %p89
      %s91 = ssub.s32 %s15, %s22
      %p92 = scmp.eq.s32.totalorder %s91, 0
      %s94 = sadd.s32 %s93, 1
      %s95 = scalar_select %p92, %s93, %s94
      %p98 = pneg %p92
      %p99 = scmp.eq.s32.totalorder %s15, 1
      %p100 = por %p98, %p99
      %p101 = scmp.ne.s32.totalorder %s93, %s96
      %p102 = scmp.eq.s32.totalorder %s15, 0
      %p103 = por %p101, %p102
      %p104 = scmp.ne.s32.totalorder %s93, %s96
      %p105 = scmp.eq.s32.totalorder %s20, 1
      %p106 = por %p104, %p105
      %p107 = scmp.ne.s32.totalorder %s96, %s97
      %p108 = scmp.eq.s32.totalorder %s20, 0
      %p109 = por %p107, %p108
      %p110 = scmp.ne.s32.totalorder %s96, %s97
      %p111 = scmp.eq.s32.totalorder %s21, 1
      %p112 = por %p110, %p111
      %p114 = scmp.ne.s32.totalorder %s97, %s113
      %p115 = scmp.eq.s32.totalorder %s21, 0
      %p116 = por %p114, %p115
      %p117 = scmp.le.s32.totalorder 1, %s15
      %p118 = scmp.lt.s32.totalorder %s15, 3
      %p119 = pnand %p117, %p118
      %p120 = pneg %p119
      // Predicated region
      $region9: #{tpu_custom_call.1} parent=5 // pred_check
        _
      $region10: #{tpu_custom_call.1} parent=5 // pred_check_branch
        %122 = sbr.rel (%p119) target = $region12
      $region11: #{tpu_custom_call.1} parent=5 // pred_region
        %s123 = ssub.s32 %s15, 1
        // Predicated region
        $region13: #{tpu_custom_call.1} parent=11 // pred_check
          %p124 = pneg %p62
        $region14: #{tpu_custom_call.1} parent=11 // pred_check_branch
          %126 = sbr.rel (%p124) target = $region16
        $region15: #{tpu_custom_call.1} parent=11 // pred_region
          _
        $region16: #{tpu_custom_call.1} parent=11 // pred_fallthru
          _
        // Predicated region
        $region17: #{tpu_custom_call.1} parent=11 // pred_check
          %p127 = pneg %p83
        $region18: #{tpu_custom_call.1} parent=11 // pred_check_branch
          %129 = sbr.rel (%p127) target = $region20
        $region19: #{tpu_custom_call.1} parent=11 // pred_region
          _
        $region20: #{tpu_custom_call.1} parent=11 // pred_fallthru
          _
      $region12: #{tpu_custom_call.1} parent=5 // pred_fallthru
        _
      %p130 = scmp.lt.s32.totalorder %s15, 2
      // Predicated region
      $region21: #{tpu_custom_call.1} parent=5 // pred_check
        %p131 = pneg %p130
      $region22: #{tpu_custom_call.1} parent=5 // pred_check_branch
        %133 = sbr.rel (%p131) target = $region24
      $region23: #{tpu_custom_call.1} parent=5 // pred_region
        // Predicated region
        $region25: #{tpu_custom_call.1} parent=23 // pred_check
          %p134 = pneg %p35
        $region26: #{tpu_custom_call.1} parent=23 // pred_check_branch
          %136 = sbr.rel (%p134) target = $region28
        $region27: #{tpu_custom_call.1} parent=23 // pred_region
          %s137 = sand.u32 %s25, 1
          %s138 = scalar_lea.sflag [#allocation4], %s137
          %s139 = sand.u32 %s25, 1
          %s140 = smul.addr %s139, 20
          %s141 = scalar_lea.vmem [#allocation3], %s140
          %s143 = ssub.s32 320, 320
          %144 = vsyncadd %s138, %s143
          %s145 = smul.addr %s15, 64
          %s146 = scalar_lea.hbm %s0, %s145
          %s147 = sshll.u32 %s141, 4
          %s148 = int_to_ptr.vmem [resolvable:$true] %s147
          %153 = dma.hbm_to_vmem [thread:$0]  %s146, 320, %s148, %s138, 128, 64, 4
        $region28: #{tpu_custom_call.1} parent=23 // pred_fallthru
          _
      $region24: #{tpu_custom_call.1} parent=5 // pred_fallthru
        _
      %p154 = scmp.le.s32.totalorder 1, %s15
      %p155 = scmp.lt.s32.totalorder %s15, 3
      %p156 = pnand %p154, %p155
      %p157 = pneg %p156
      // Predicated region
      $region29: #{tpu_custom_call.1} parent=5 // pred_check
        _
      $region30: #{tpu_custom_call.1} parent=5 // pred_check_branch
        %159 = sbr.rel (%p156) target = $region32
      $region31: #{tpu_custom_call.1} parent=5 // pred_region
        %s160 = ssub.s32 %s15, 1
        %s161 = sand.u32 %s28, 1
        %s162 = scalar_lea.sflag [#allocation4], %s161
        %s163 = sand.u32 %s28, 1
        %s164 = smul.addr %s163, 20
        %s165 = scalar_lea.vmem [#allocation3], %s164
        // Predicated region
        $region33: #{tpu_custom_call.1} parent=31 // pred_check
          %p166 = pneg %p41
        $region34: #{tpu_custom_call.1} parent=31 // pred_check_branch
          %168 = sbr.rel (%p166) target = $region36
        $region35: #{tpu_custom_call.1} parent=31 // pred_region
          %169 = dma.done %s162, 320
        $region36: #{tpu_custom_call.1} parent=31 // pred_fallthru
          _
        %s170 = sand.u32 %s28, 1
        %s171 = scalar_lea.sflag [#allocation4], %s170
        %s172 = sand.u32 %s28, 1
        %s173 = smul.addr %s172, 20
        %s174 = scalar_lea.vmem [#allocation3], %s173
        %p175 = pneg %p41
        %p176 = pneg %p38
        %p177 = pneg %p62
        %p178 = pneg %p59
        %p179 = pneg %p83
        %p180 = pneg %p80
        %p181 = pneg %p109
        %p182 = pneg %p106
        %s183 = sand.u32 %s96, 1
        %s184 = scalar_lea.sflag [#allocation5], %s183
        %s185 = sand.u32 %s96, 1
        %s186 = smul.addr %s185, 8
        %s187 = scalar_lea.vmem [#allocation6], %s186
        %v188 = vld [vmem:[%s165] sm:$0xf]
        %vm189 = vcmask 1043456
        %v190 = vsel %vm189, %v188, 0.0
        %s191 = scalar_lea.vmem %s165, 4 [#allocation3]
        %v192 = vld [vmem:[%s191] sm:$0xf]
        %v193 = vsel %vm189, %v192, 0.25
        %s194 = scalar_lea.vmem %s165, 8 [#allocation3]
        %v195 = vld [vmem:[%s194] sm:$0xf]
        %v196 = vsel %vm189, %v195, 0.5
        %s197 = scalar_lea.vmem %s165, 12 [#allocation3]
        %v198 = vld [vmem:[%s197] sm:$0xf]
        %v199 = vsel %vm189, %v198, 0.75
        %s200 = scalar_lea.vmem %s165, 16 [#allocation3]
        %v201 = vld [vmem:[%s200] sm:$0xf]
        %v202 = vsel %vm189, %v201, 1.0
        %v203 = vlaneseq
        %v204 = vshrl.u32 %v203, 7
        %v205 = vsub.s32 0, %v204
        %v206 = vrot.slane %v190, %v205
        %v207 = vmul.f32 %v206, %v190
        %v208 = vlaneseq
        %v209 = vshrl.u32 %v208, 7
        %v210 = vsub.s32 1, %v209
        %v211 = vrot.slane %v190, %v210
        %v212 = vmul.f32 %v211, %v190
        %v213 = vlaneseq
        %v214 = vshrl.u32 %v213, 7
        %v215 = vsub.s32 2, %v214
        %v216 = vrot.slane %v190, %v215
        %v217 = vmul.f32 %v216, %v190
        %v218 = vlaneseq
        %v219 = vshrl.u32 %v218, 7
        %v220 = vsub.s32 3, %v219
        %v221 = vrot.slane %v190, %v220
        %v222 = vmul.f32 %v221, %v190
        %v223 = vlaneseq
        %v224 = vshrl.u32 %v223, 7
        %v225 = vsub.s32 4, %v224
        %v226 = vrot.slane %v190, %v225
        %v227 = vmul.f32 %v226, %v190
        %v229 = vrot.slane %v212, 3
        %v232 = vrot.slane %v217, 6
        %v235 = vrot.slane %v222, 1
        %v238 = vrot.slane %v227, 4
        %vm240 = vcmask 1044480
        %v241 = vsel %vm240, %v207, %v229
        %vm242 = vcmask 1041408
        %v243 = vsel %vm242, %v229, %v232
        %vm244 = vcmask 1046528
        %v245 = vsel %vm244, %v243, %v235
        %v246 = vsel %vm189, %v235, %v238
        %v247 = vmul.f32 %v241, 0.5
        %v248 = vmul.f32 %v245, 0.5
        %v249 = vmul.f32 %v246, 0.5
        %v250 = vmul.f32 %v238, 0.5
        %v251 = vsub.f32 %v193, %v190
        %v252 = vlaneseq
        %v253 = vshrl.u32 %v252, 7
        %v254 = vsub.s32 0, %v253
        %v255 = vrot.slane %v251, %v254
        %v256 = vmul.f32 %v255, %v251
        %v257 = vlaneseq
        %v258 = vshrl.u32 %v257, 7
        %v259 = vsub.s32 1, %v258
        %v260 = vrot.slane %v251, %v259
        %v261 = vmul.f32 %v260, %v251
        %v262 = vlaneseq
        %v263 = vshrl.u32 %v262, 7
        %v264 = vsub.s32 2, %v263
        %v265 = vrot.slane %v251, %v264
        %v266 = vmul.f32 %v265, %v251
        %v267 = vlaneseq
        %v268 = vshrl.u32 %v267, 7
        %v269 = vsub.s32 3, %v268
        %v270 = vrot.slane %v251, %v269
        %v271 = vmul.f32 %v270, %v251
        %v272 = vlaneseq
        %v273 = vshrl.u32 %v272, 7
        %v274 = vsub.s32 4, %v273
        %v275 = vrot.slane %v251, %v274
        %v276 = vmul.f32 %v275, %v251
        %v278 = vrot.slane %v261, 3
        %v281 = vrot.slane %v266, 6
        %v284 = vrot.slane %v271, 1
        %v287 = vrot.slane %v276, 4
        %v289 = vsel %vm240, %v256, %v278
        %v290 = vsel %vm242, %v278, %v281
        %v291 = vsel %vm244, %v290, %v284
        %v292 = vsel %vm189, %v284, %v287
        %v293 = vmul.f32 %v289, 0.5
        %v294 = vmul.f32 %v291, 0.5
        %v295 = vmul.f32 %v292, 0.5
        %v296 = vmul.f32 %v287, 0.5
        %v297 = vadd.f32 %v190, %v251
        %v298 = vadd.f32 %v247, %v293
        %v299 = vadd.f32 %v248, %v294
        %v300 = vadd.f32 %v249, %v295
        %v301 = vadd.f32 %v250, %v296
        %v302 = vmul.f32 %v206, %v251
        %v303 = vmul.f32 %v211, %v251
        %v304 = vmul.f32 %v216, %v251
        %v305 = vmul.f32 %v221, %v251
        %v306 = vmul.f32 %v226, %v251
        %v308 = vrot.slane %v303, 3
        %v311 = vrot.slane %v304, 6
        %v314 = vrot.slane %v305, 1
        %v317 = vrot.slane %v306, 4
        %v319 = vsel %vm240, %v302, %v308
        %v320 = vsel %vm242, %v308, %v311
        %v321 = vsel %vm244, %v320, %v314
        %v322 = vsel %vm189, %v314, %v317
        %v323 = vadd.f32 %v298, %v319
        %v324 = vadd.f32 %v299, %v321
        %v325 = vadd.f32 %v300, %v322
        %v326 = vadd.f32 %v301, %v317
        %v327 = vsub.f32 %v196, %v193
        %v328 = vlaneseq
        %v329 = vshrl.u32 %v328, 7
        %v330 = vsub.s32 0, %v329
        %v331 = vrot.slane %v327, %v330
        %v332 = vmul.f32 %v331, %v327
        %v333 = vlaneseq
        %v334 = vshrl.u32 %v333, 7
        %v335 = vsub.s32 1, %v334
        %v336 = vrot.slane %v327, %v335
        %v337 = vmul.f32 %v336, %v327
        %v338 = vlaneseq
        %v339 = vshrl.u32 %v338, 7
        %v340 = vsub.s32 2, %v339
        %v341 = vrot.slane %v327, %v340
        %v342 = vmul.f32 %v341, %v327
        %v343 = vlaneseq
        %v344 = vshrl.u32 %v343, 7
        %v345 = vsub.s32 3, %v344
        %v346 = vrot.slane %v327, %v345
        %v347 = vmul.f32 %v346, %v327
        %v348 = vlaneseq
        %v349 = vshrl.u32 %v348, 7
        %v350 = vsub.s32 4, %v349
        %v351 = vrot.slane %v327, %v350
        %v352 = vmul.f32 %v351, %v327
        %v354 = vrot.slane %v337, 3
        %v357 = vrot.slane %v342, 6
        %v360 = vrot.slane %v347, 1
        %v363 = vrot.slane %v352, 4
        %v365 = vsel %vm240, %v332, %v354
        %v366 = vsel %vm242, %v354, %v357
        %v367 = vsel %vm244, %v366, %v360
        %v368 = vsel %vm189, %v360, %v363
        %v369 = vmul.f32 %v365, 0.5
        %v370 = vmul.f32 %v367, 0.5
        %v371 = vmul.f32 %v368, 0.5
        %v372 = vmul.f32 %v363, 0.5
        %v373 = vadd.f32 %v297, %v327
        %v374 = vadd.f32 %v323, %v369
        %v375 = vadd.f32 %v324, %v370
        %v376 = vadd.f32 %v325, %v371
        %v377 = vadd.f32 %v326, %v372
        %v378 = vlaneseq
        %v379 = vshrl.u32 %v378, 7
        %v380 = vsub.s32 0, %v379
        %v381 = vrot.slane %v297, %v380
        %v382 = vmul.f32 %v381, %v327
        %v383 = vlaneseq
        %v384 = vshrl.u32 %v383, 7
        %v385 = vsub.s32 1, %v384
        %v386 = vrot.slane %v297, %v385
        %v387 = vmul.f32 %v386, %v327
        %v388 = vlaneseq
        %v389 = vshrl.u32 %v388, 7
        %v390 = vsub.s32 2, %v389
        %v391 = vrot.slane %v297, %v390
        %v392 = vmul.f32 %v391, %v327
        %v393 = vlaneseq
        %v394 = vshrl.u32 %v393, 7
        %v395 = vsub.s32 3, %v394
        %v396 = vrot.slane %v297, %v395
        %v397 = vmul.f32 %v396, %v327
        %v398 = vlaneseq
        %v399 = vshrl.u32 %v398, 7
        %v400 = vsub.s32 4, %v399
        %v401 = vrot.slane %v297, %v400
        %v402 = vmul.f32 %v401, %v327
        %v404 = vrot.slane %v387, 3
        %v407 = vrot.slane %v392, 6
        %v410 = vrot.slane %v397, 1
        %v413 = vrot.slane %v402, 4
        %v415 = vsel %vm240, %v382, %v404
        %v416 = vsel %vm242, %v404, %v407
        %v417 = vsel %vm244, %v416, %v410
        %v418 = vsel %vm189, %v410, %v413
        %v419 = vadd.f32 %v374, %v415
        %v420 = vadd.f32 %v375, %v417
        %v421 = vadd.f32 %v376, %v418
        %v422 = vadd.f32 %v377, %v413
        %v423 = vsub.f32 %v199, %v196
        %v424 = vlaneseq
        %v425 = vshrl.u32 %v424, 7
        %v426 = vsub.s32 0, %v425
        %v427 = vrot.slane %v423, %v426
        %v428 = vmul.f32 %v427, %v423
        %v429 = vlaneseq
        %v430 = vshrl.u32 %v429, 7
        %v431 = vsub.s32 1, %v430
        %v432 = vrot.slane %v423, %v431
        %v433 = vmul.f32 %v432, %v423
        %v434 = vlaneseq
        %v435 = vshrl.u32 %v434, 7
        %v436 = vsub.s32 2, %v435
        %v437 = vrot.slane %v423, %v436
        %v438 = vmul.f32 %v437, %v423
        %v439 = vlaneseq
        %v440 = vshrl.u32 %v439, 7
        %v441 = vsub.s32 3, %v440
        %v442 = vrot.slane %v423, %v441
        %v443 = vmul.f32 %v442, %v423
        %v444 = vlaneseq
        %v445 = vshrl.u32 %v444, 7
        %v446 = vsub.s32 4, %v445
        %v447 = vrot.slane %v423, %v446
        %v448 = vmul.f32 %v447, %v423
        %v450 = vrot.slane %v433, 3
        %v453 = vrot.slane %v438, 6
        %v456 = vrot.slane %v443, 1
        %v459 = vrot.slane %v448, 4
        %v461 = vsel %vm240, %v428, %v450
        %v462 = vsel %vm242, %v450, %v453
        %v463 = vsel %vm244, %v462, %v456
        %v464 = vsel %vm189, %v456, %v459
        %v465 = vmul.f32 %v461, 0.5
        %v466 = vmul.f32 %v463, 0.5
        %v467 = vmul.f32 %v464, 0.5
        %v468 = vmul.f32 %v459, 0.5
        %v469 = vadd.f32 %v373, %v423
        %v470 = vadd.f32 %v419, %v465
        %v471 = vadd.f32 %v420, %v466
        %v472 = vadd.f32 %v421, %v467
        %v473 = vadd.f32 %v422, %v468
        %v474 = vlaneseq
        %v475 = vshrl.u32 %v474, 7
        %v476 = vsub.s32 0, %v475
        %v477 = vrot.slane %v373, %v476
        %v478 = vmul.f32 %v477, %v423
        %v479 = vlaneseq
        %v480 = vshrl.u32 %v479, 7
        %v481 = vsub.s32 1, %v480
        %v482 = vrot.slane %v373, %v481
        %v483 = vmul.f32 %v482, %v423
        %v484 = vlaneseq
        %v485 = vshrl.u32 %v484, 7
        %v486 = vsub.s32 2, %v485
        %v487 = vrot.slane %v373, %v486
        %v488 = vmul.f32 %v487, %v423
        %v489 = vlaneseq
        %v490 = vshrl.u32 %v489, 7
        %v491 = vsub.s32 3, %v490
        %v492 = vrot.slane %v373, %v491
        %v493 = vmul.f32 %v492, %v423
        %v494 = vlaneseq
        %v495 = vshrl.u32 %v494, 7
        %v496 = vsub.s32 4, %v495
        %v497 = vrot.slane %v373, %v496
        %v498 = vmul.f32 %v497, %v423
        %v500 = vrot.slane %v483, 3
        %v503 = vrot.slane %v488, 6
        %v506 = vrot.slane %v493, 1
        %v509 = vrot.slane %v498, 4
        %v511 = vsel %vm240, %v478, %v500
        %v512 = vsel %vm242, %v500, %v503
        %v513 = vsel %vm244, %v512, %v506
        %v514 = vsel %vm189, %v506, %v509
        %v515 = vadd.f32 %v470, %v511
        %v516 = vadd.f32 %v471, %v513
        %v517 = vadd.f32 %v472, %v514
        %v518 = vadd.f32 %v473, %v509
        %v519 = vsub.f32 %v202, %v199
        %v520 = vlaneseq
        %v521 = vshrl.u32 %v520, 7
        %v522 = vsub.s32 0, %v521
        %v523 = vrot.slane %v519, %v522
        %v524 = vmul.f32 %v523, %v519
        %v525 = vlaneseq
        %v526 = vshrl.u32 %v525, 7
        %v527 = vsub.s32 1, %v526
        %v528 = vrot.slane %v519, %v527
        %v529 = vmul.f32 %v528, %v519
        %v530 = vlaneseq
        %v531 = vshrl.u32 %v530, 7
        %v532 = vsub.s32 2, %v531
        %v533 = vrot.slane %v519, %v532
        %v534 = vmul.f32 %v533, %v519
        %v535 = vlaneseq
        %v536 = vshrl.u32 %v535, 7
        %v537 = vsub.s32 3, %v536
        %v538 = vrot.slane %v519, %v537
        %v539 = vmul.f32 %v538, %v519
        %v540 = vlaneseq
        %v541 = vshrl.u32 %v540, 7
        %v542 = vsub.s32 4, %v541
        %v543 = vrot.slane %v519, %v542
        %v544 = vmul.f32 %v543, %v519
        %v546 = vrot.slane %v529, 3
        %v549 = vrot.slane %v534, 6
        %v552 = vrot.slane %v539, 1
        %v555 = vrot.slane %v544, 4
        %v557 = vsel %vm240, %v524, %v546
        %v558 = vsel %vm242, %v546, %v549
        %v559 = vsel %vm244, %v558, %v552
        %v560 = vsel %vm189, %v552, %v555
        %v561 = vmul.f32 %v557, 0.5
        %v562 = vmul.f32 %v559, 0.5
        %v563 = vmul.f32 %v560, 0.5
        %v564 = vmul.f32 %v555, 0.5
        %v565 = vadd.f32 %v469, %v519
        %v566 = vadd.f32 %v515, %v561
        %v567 = vadd.f32 %v516, %v562
        %v568 = vadd.f32 %v517, %v563
        %v569 = vadd.f32 %v518, %v564
        %v570 = vlaneseq
        %v571 = vshrl.u32 %v570, 7
        %v572 = vsub.s32 0, %v571
        %v573 = vrot.slane %v469, %v572
        %v574 = vmul.f32 %v573, %v519
        %v575 = vlaneseq
        %v576 = vshrl.u32 %v575, 7
        %v577 = vsub.s32 1, %v576
        %v578 = vrot.slane %v469, %v577
        %v579 = vmul.f32 %v578, %v519
        %v580 = vlaneseq
        %v581 = vshrl.u32 %v580, 7
        %v582 = vsub.s32 2, %v581
        %v583 = vrot.slane %v469, %v582
        %v584 = vmul.f32 %v583, %v519
        %v585 = vlaneseq
        %v586 = vshrl.u32 %v585, 7
        %v587 = vsub.s32 3, %v586
        %v588 = vrot.slane %v469, %v587
        %v589 = vmul.f32 %v588, %v519
        %v590 = vlaneseq
        %v591 = vshrl.u32 %v590, 7
        %v592 = vsub.s32 4, %v591
        %v593 = vrot.slane %v469, %v592
        %v594 = vmul.f32 %v593, %v519
        %v596 = vrot.slane %v579, 3
        %v599 = vrot.slane %v584, 6
        %v602 = vrot.slane %v589, 1
        %v605 = vrot.slane %v594, 4
        %v607 = vsel %vm240, %v574, %v596
        %v608 = vsel %vm242, %v596, %v599
        %v609 = vsel %vm244, %v608, %v602
        %v610 = vsel %vm189, %v602, %v605
        %v611 = vadd.f32 %v566, %v607
        %v612 = vadd.f32 %v567, %v609
        %v613 = vadd.f32 %v568, %v610
        %v614 = vadd.f32 %v569, %v605
        %615 = vst [vmem:[#allocation2] sm:$0x1f] %v565
        %616 = vst [vmem:[#allocation2 + $0x5] sm:$0xff] %v611
        %617 = vst [vmem:[#allocation2 + $0xd] sm:$0xff] %v612
        %618 = vst [vmem:[#allocation2 + $0x15] sm:$0xff] %v613
        %619 = vst [vmem:[#allocation2 + $0x1d] sm:$0x1] %v614
        %v620 = vld [vmem:[%s1] sm:$0xff]
        %v621 = vld [vmem:[#allocation2] sm:$0xff]
        %v622 = vld [vmem:[#allocation2 + $0x8] sm:$0xff]
        %v623 = vld [vmem:[#allocation2 + $0x10] sm:$0xff]
        %v624 = vld [vmem:[#allocation2 + $0x18] sm:$0x3f]
        %v625 = vld [vmem:[%s2] sm:$0xff]
        %627 = vset.pattern.permute.xlu0 0
        %628 = vperm.xlu0 %627, %v625
        %v629 = vpop.permute.xlu0 %628
        %vm631 = vcmask 244736
        %v633 = vsel %vm631, %v620, 0
        %vm635 = vcmask 1045504
        %v637 = vsel %vm635, %v624, 0
        %639 = vmatprep.subr.mxu0 0.0
        %640 = vmatpush1.msra.mxu0 %v621
        %641 = vmatprep.subr.mxu0 0.0
        %642 = vmatpush1.msra.mxu0 %v622
        %643 = vmatprep.subr.mxu0 0.0
        %644 = vmatpush1.msra.mxu0 %v623
        %645 = vmatprep.subr.mxu0 0.0
        %646 = vmatpush1.msra.mxu0 %v637
        %647 = vmatprep.subr.mxu0 0.0
        %648 = vmatpush1.msra.mxu0 0.0
        %649 = vmatprep.subr.mxu0 0.0
        %650 = vmatpush1.msra.mxu0 0.0
        %651 = vmatprep.subr.mxu0 0.0
        %652 = vmatpush1.msra.mxu0 0.0
        %653 = vmatprep.subr.mxu0 0.0
        %654 = vmatpush1.msra.mxu0 0.0
        %655 = vmatprep.subr.mxu0 0.0
        %656 = vmatpush1.msra.mxu0 0.0
        %657 = vmatprep.subr.mxu0 0.0
        %658 = vmatpush1.msra.mxu0 0.0
        %659 = vmatprep.subr.mxu0 0.0
        %660 = vmatpush1.msra.mxu0 0.0
        %661 = vmatprep.subr.mxu0 0.0
        %662 = vmatpush1.msra.mxu0 0.0
        %663 = vmatprep.subr.mxu0 0.0
        %664 = vmatpush1.msra.mxu0 0.0
        %665 = vmatprep.subr.mxu0 0.0
        %666 = vmatpush1.msra.mxu0 0.0
        %667 = vmatprep.subr.mxu0 0.0
        %668 = vmatpush1.msra.mxu0 0.0
        %669 = vmatprep.subr.mxu0 0.0
        %670 = vmatpush1.msra.mxu0 0.0
        %671 = vmatprep.subr.mxu0 0.0
        %672 = vmatpush1.msra.mxu0 0.0
        %673 = vmatprep.subr.mxu0 0.0
        %674 = vmatpush1.msra.mxu0 0.0
        %675 = vmatprep.subr.mxu0 0.0
        %676 = vmatpush1.msra.mxu0 0.0
        %677 = vmatprep.subr.mxu0 0.0
        %678 = vmatpush1.msra.mxu0 0.0
        %679 = vmatprep.subr.mxu0 0.0
        %680 = vmatpush1.msra.mxu0 0.0
        %681 = vmatprep.subr.mxu0 0.0
        %682 = vmatpush1.msra.mxu0 0.0
        %683 = vmatprep.subr.mxu0 0.0
        %684 = vmatpush1.msra.mxu0 0.0
        %685 = vmatprep.subr.mxu0 0.0
        %686 = vmatpush1.msra.mxu0 0.0
        %687 = vmatprep.subr.mxu0 0.0
        %688 = vmatpush1.msra.mxu0 0.0
        %689 = vmatprep.subr.mxu0 0.0
        %690 = vmatpush1.msra.mxu0 0.0
        %691 = vmatprep.subr.mxu0 0.0
        %692 = vmatpush1.msra.mxu0 0.0
        %693 = vmatprep.subr.mxu0 0.0
        %694 = vmatpush1.msra.mxu0 0.0
        %695 = vmatprep.subr.mxu0 0.0
        %696 = vmatpush1.msra.mxu0 0.0
        %697 = vmatprep.subr.mxu0 0.0
        %698 = vmatpush1.msra.mxu0 0.0
        %699 = vmatprep.subr.mxu0 0.0
        %700 = vmatpush1.msra.mxu0 0.0
        %701 = vmatprep.subr.mxu0 0.0
        %702 = vmatpush1.msra.mxu0 0.0
        %703 = vmatprep.mubr.f32.mxu0 0.0
        %704 = vmatmul.mubr.f32.gmra.mrb[0].mxu0 %v633
        %v705 = vpop.f32.mrb[0].mxu0
        %v706 = vadd.f32 %v629, %v705
        %v707 = vpop.f32.mrb[0].mxu0
        %708 = vdwg.mxu0
        %709 = vst [vmem:[%s187] sm:$0xff] %v706
        %s710 = sand.u32 %s96, 1
        %s711 = scalar_lea.sflag [#allocation5], %s710
        %s712 = sand.u32 %s96, 1
        %s713 = smul.addr %s712, 8
        %s714 = scalar_lea.vmem [#allocation6], %s713
        // Predicated region
        $region37: #{tpu_custom_call.1} parent=31 // pred_check
          %p715 = pneg %p106
        $region38: #{tpu_custom_call.1} parent=31 // pred_check_branch
          %717 = sbr.rel (%p715) target = $region40
        $region39: #{tpu_custom_call.1} parent=31 // pred_region
          %s719 = ssub.s32 128, 128
          %720 = vsyncadd %s711, %s719
          %s721 = smul.addr %s20, 128
          %s722 = scalar_lea.hbm %s3, %s721
          %s724 = sshll.u32 %s714, 4
          %s725 = int_to_ptr.vmem [resolvable:$true] %s724
          %727 = dma.vmem_to_hbm [thread:$0]  %s725, 128, %s722, %s711
        $region40: #{tpu_custom_call.1} parent=31 // pred_fallthru
          _
      $region32: #{tpu_custom_call.1} parent=5 // pred_fallthru
        _
      %p728 = scmp.le.s32.totalorder 2, %s15
      // Predicated region
      $region41: #{tpu_custom_call.1} parent=5 // pred_check
        %p729 = pneg %p728
      $region42: #{tpu_custom_call.1} parent=5 // pred_check_branch
        %731 = sbr.rel (%p729) target = $region44
      $region43: #{tpu_custom_call.1} parent=5 // pred_region
        %s732 = ssub.s32 %s15, 2
        // Predicated region
        $region45: #{tpu_custom_call.1} parent=43 // pred_check
          %p733 = pneg %p112
        $region46: #{tpu_custom_call.1} parent=43 // pred_check_branch
          %735 = sbr.rel (%p733) target = $region48
        $region47: #{tpu_custom_call.1} parent=43 // pred_region
          %s736 = sand.u32 %s97, 1
          %s737 = scalar_lea.sflag [#allocation5], %s736
          %s738 = sand.u32 %s97, 1
          %s739 = smul.addr %s738, 8
          %s740 = scalar_lea.vmem [#allocation6], %s739
          %741 = dma.done %s737, 128
        $region48: #{tpu_custom_call.1} parent=43 // pred_fallthru
          _
      $region44: #{tpu_custom_call.1} parent=5 // pred_fallthru
        _
    $region6: #{tpu_custom_call.1} parent=1 // loop_footer
      %s19 = sadd.s32 1, %s15
    $region7: #{tpu_custom_call.1} parent=1 // loop_footer_branch
      %14 = sbr.rel target = $region3
    $region8: #{tpu_custom_call.1} parent=1 // loop_exit
      _
    %742 = vsyncpa [#allocation4], 1
    %s743 = scalar_lea.sflag [#allocation4], 1
    %744 = vsyncpa %s743, 1
    %745 = vsyncpa [#allocation5], 1
    %s746 = scalar_lea.sflag [#allocation5], 1
    %747 = vsyncpa %s746, 1

</llo_original>
